<compile_context>
chip_gen: v5e
topology: v5e:2x2
jax: 0.10.0
libtpu: 0.0.40
codegen_flags: <defaults>
</compile_context>

<pallas_src>
import functools
import math

import jax
import jax.numpy as jnp
from jax import lax
from jax.experimental import pallas as pl
from jax.experimental.pallas import tpu as pltpu

_VMEM_LIMIT_BYTES = 32 * 1024 * 1024  # above v5e's 16 MiB scoped default, <= half of v7x's 64 MiB


# --------------------------- Pallas kernels ---------------------------------

def _head_kernel(a_ref, woff_ref, boff_ref, wmod_ref, bmod_ref, off_ref, mod_ref):
    """Fused offset + modulator conv heads on one shared im2col tile (transposed GEMM).

    a:    [K, tile_m] f32  (K = C_in*kh*kw; tile_m on the lane axis)
    woff: [2kk, K] f32, boff: [2kk, 1] f32  ->  off = woff @ a + boff      (raw offsets)
    wmod: [kk,  K] f32, bmod: [kk,  1] f32  ->  mod = 1 + tanh(0.5*(wmod@a + bmod))
    (1 + tanh(z/2) == 2*sigmoid(z): one EUP op, applied to modulator columns only.)
    """
    a = a_ref[...]
    off = jnp.dot(woff_ref[...], a, preferred_element_type=jnp.float32)
    off_ref[...] = off + boff_ref[...]
    mod = jnp.dot(wmod_ref[...], a, preferred_element_type=jnp.float32) + bmod_ref[...]
    mod_ref[...] = (1.0 + jnp.tanh(0.5 * mod)).astype(mod_ref.dtype)


def _deform_kernel(cols_ref, mask_ref, w_ref, bias_ref, o_ref, *, cin):
    """out_T = W @ (cols_T * tile(mask_T, cin)) + bias — modulated deformable-conv GEMM.

    cols: [cin*kk, tile_m] bf16 (row order ci*kk + k), mask: [kk, tile_m] bf16,
    W: [C_out, cin*kk] bf16, bias: [C_out, 1] f32, out: [C_out, tile_m] f32 (lane-dense).
    The mask is broadcast across the channel axis in-register (sublane tiling) instead
    of being materialized at [K, M] in HBM; the multiply runs in f32 with a single
    downcast of the product (no emulated bf16 VALU math on v5e).
    """
    mask = jnp.tile(mask_ref[...].astype(jnp.float32), (cin, 1))       # [cin*kk, tile_m]
    a = (cols_ref[...] * mask).astype(jnp.bfloat16)                    # one downcast
    acc = jnp.dot(w_ref[...], a, preferred_element_type=jnp.float32)   # bf16 MXU, f32 acc
    o_ref[...] = (acc + bias_ref[...]).astype(o_ref.dtype)


# --------------------------- Pallas wrappers ---------------------------------

def _round_up(v, mult):
    return ((v + mult - 1) // mult) * mult


def _pad_cols(a, mp):
    m = a.shape[1]
    return a if m == mp else jnp.pad(a, ((0, 0), (0, mp - m)))


def _choose_tile_m(m, target=4096, min_steps=4):
    """Pick the GEMM M tile (lane axis).

    Prefer a tile that divides M exactly (no pad-then-slice HBM round-trip) while
    keeping >= min_steps grid steps (>= 2 per v7x TensorCore so megacore sharding
    still overlaps DMA within each core); otherwise relax to any divisor, then pad.
    """
    target = max(128, min(target, _round_up(m, 128)))
    candidates = list(range(target, 127, -128))
    for t in candidates:
        if m % t == 0 and m // t >= min_steps:
            return t, m
    for t in candidates:
        if m % t == 0:
            return t, m
    return 128, _round_up(m, 128)


def head_gemm(a_t, w_off, b_off, w_mod, b_mod, *, tile_m_target=4096):
    """Fused offset/modulator head on the transposed im2col matrix.

    a_t: [K, M] f32.  Returns (offset_T [2kk, M] f32, modulator_T [kk, M] bf16,
    where modulator already equals 2*sigmoid(conv)).
    Kept in f32 end-to-end: offsets feed bilinear sampling coordinates.
    """
    k, m = a_t.shape
    n_off = w_off.shape[0]
    n_mod = w_mod.shape[0]
    tm, mp = _choose_tile_m(m, tile_m_target)
    a_t = _pad_cols(a_t.astype(jnp.float32), mp)
    w_off = w_off.astype(jnp.float32)
    w_mod = w_mod.astype(jnp.float32)
    b_off = b_off.reshape(n_off, 1).astype(jnp.float32)
    b_mod = b_mod.reshape(n_mod, 1).astype(jnp.float32)

    cost = pl.CostEstimate(
        flops=2 * mp * k * (n_off + n_mod),
        transcendentals=mp * n_mod,
        bytes_accessed=mp * k * 4 + k * (n_off + n_mod) * 4
                       + mp * n_off * 4 + mp * n_mod * 2)

    off_t, mod_t = pl.pallas_call(
        _head_kernel,
        out_shape=(jax.ShapeDtypeStruct((n_off, mp), jnp.float32),
                   jax.ShapeDtypeStruct((n_mod, mp), jnp.bfloat16)),
        grid=(mp // tm,),
        in_specs=[
            pl.BlockSpec((k, tm), lambda i: (0, i)),
            pl.BlockSpec((n_off, k), lambda i: (0, 0)),
            pl.BlockSpec((n_off, 1), lambda i: (0, 0)),
            pl.BlockSpec((n_mod, k), lambda i: (0, 0)),
            pl.BlockSpec((n_mod, 1), lambda i: (0, 0)),
        ],
        out_specs=(pl.BlockSpec((n_off, tm), lambda i: (0, i)),
                   pl.BlockSpec((n_mod, tm), lambda i: (0, i))),
        compiler_params=pltpu.CompilerParams(
            dimension_semantics=("parallel",),
            vmem_limit_bytes=_VMEM_LIMIT_BYTES),
        cost_estimate=cost,
    )(a_t, w_off, b_off, w_mod, b_mod)

    if mp != m:                       # only when no exact-divisor tile exists
        off_t = off_t[:, :m]
        mod_t = mod_t[:, :m]
    return off_t, mod_t


def deform_gemm(cols_t, mask_t, w, bias, *, cin, tile_m_target=4096):
    """Modulated deformable conv GEMM: out_T = W @ (cols_T * broadcast(mask_T)) + bias.

    cols_t: [K, M] bf16, mask_t: [kk, M] bf16, w: [C_out, K], bias: [C_out].
    Returns out_T [C_out, M] f32 (lane-dense; no 128-column padding, no trailing slice
    when a divides-M tile exists).
    """
    k, m = cols_t.shape
    kk = mask_t.shape[0]
    cout = w.shape[0]
    tm, mp = _choose_tile_m(m, tile_m_target)
    cols_t = _pad_cols(cols_t.astype(jnp.bfloat16), mp)
    mask_t = _pad_cols(mask_t.astype(jnp.bfloat16), mp)
    w = w.astype(jnp.bfloat16)
    bias = bias.reshape(cout, 1).astype(jnp.float32)

    cost = pl.CostEstimate(
        flops=2 * mp * k * cout,
        transcendentals=0,
        bytes_accessed=mp * k * 2 + mp * kk * 2 + cout * k * 2 + mp * cout * 4)

    out_t = pl.pallas_call(
        functools.partial(_deform_kernel, cin=cin),
        out_shape=jax.ShapeDtypeStruct((cout, mp), jnp.float32),
        grid=(mp // tm,),
        in_specs=[
            pl.BlockSpec((k, tm), lambda i: (0, i)),
            pl.BlockSpec((kk, tm), lambda i: (0, i)),
            pl.BlockSpec((cout, k), lambda i: (0, 0)),
            pl.BlockSpec((cout, 1), lambda i: (0, 0)),
        ],
        out_specs=pl.BlockSpec((cout, tm), lambda i: (0, i)),
        compiler_params=pltpu.CompilerParams(
            dimension_semantics=("parallel",),
            vmem_limit_bytes=_VMEM_LIMIT_BYTES),
        cost_estimate=cost,
    )(cols_t, mask_t, w, bias)

    return out_t if mp == m else out_t[:, :m]


# --------------------------- JAX glue (im2col / sampling) --------------------

def im2col_t(x, kh, kw, stride, pad):
    """Regular im2col, transposed: returns [C*kh*kw, N*Ho*Wo] with row order ci*kk + k."""
    # TODO(synk): could be folded into the head kernel with halo'd row-tile DMAs
    # (static shifts / pltpu.roll in VMEM) to cut the kh*kw x activation-read blowup.
    n, c, h, w = x.shape
    sh, sw = stride
    ph, pw = pad
    xp = jnp.pad(x, ((0, 0), (0, 0), (ph, ph), (pw, pw)))
    hout = (h + 2 * ph - kh) // sh + 1
    wout = (w + 2 * pw - kw) // sw + 1
    patches = [xp[:, :, i:i + hout * sh:sh, j:j + wout * sw:sw]
               for i in range(kh) for j in range(kw)]
    p = jnp.stack(patches, axis=2)               # (N, C, kk, Ho, Wo)
    p = p.transpose(1, 2, 0, 3, 4)               # (C, kk, N, Ho, Wo)
    return p.reshape(c * kh * kw, n * hout * wout), hout, wout


def deformable_im2col_t(x, offset_t, kh, kw, stride, pad, hout, wout):
    """Bilinear-sampled im2col (torchvision deform_conv2d semantics), transposed.

    offset_t: [2*kk, M] f32 with row order 2*k + {0:dy, 1:dx}; columns in (n, ho, wo)
    order.  Returns cols_T [C*kk, M] bf16 with row order ci*kk + k.
    """
    # TODO(synk): data-dependent bilinear gather stays in plain JAX (no efficient Pallas
    # TPU gather); fusing it with the mask multiply + GEMM via manual DMA is future work.
    n, c, h, w = x.shape
    kk = kh * kw
    sh, sw = stride
    ph, pw = pad
    m = n * hout * wout

    off = offset_t.reshape(kk, 2, n, hout, wout)
    dy = off[:, 0].transpose(1, 0, 2, 3)          # (N, kk, Ho, Wo)
    dx = off[:, 1].transpose(1, 0, 2, 3)

    ky = (jnp.arange(kk) // kw).astype(jnp.float32)
    kx = (jnp.arange(kk) % kw).astype(jnp.float32)
    base_y = jnp.arange(hout, dtype=jnp.float32) * sh - ph
    base_x = jnp.arange(wout, dtype=jnp.float32) * sw - pw
    py = ky[None, :, None, None] + base_y[None, None, :, None] + dy    # (N, kk, Ho, Wo)
    px = kx[None, :, None, None] + base_x[None, None, None, :] + dx

    y0 = jnp.floor(py)
    x0 = jnp.floor(px)
    wy1 = py - y0
    wx1 = px - x0
    wy0 = 1.0 - wy1
    wx0 = 1.0 - wx1

    x_flat = x.reshape(n, c, h * w)

    def gather(yc, xc):
        valid = (yc >= 0) & (yc < h) & (xc >= 0) & (xc < w)
        yi = jnp.clip(yc, 0, h - 1).astype(jnp.int32)
        xi = jnp.clip(xc, 0, w - 1).astype(jnp.int32)
        flat = (yi * w + xi).reshape(n, 1, kk * hout * wout)
        idx = jnp.broadcast_to(flat, (n, c, kk * hout * wout))
        g = jnp.take_along_axis(x_flat, idx, axis=2).reshape(n, c, kk, hout, wout)
        return g * valid[:, None].astype(x.dtype)

    samp = (wy0 * wx0)[:, None] * gather(y0, x0) \
         + (wy0 * wx1)[:, None] * gather(y0, x0 + 1) \
         + (wy1 * wx0)[:, None] * gather(y0 + 1, x0) \
         + (wy1 * wx1)[:, None] * gather(y0 + 1, x0 + 1)   # (N, C, kk, Ho, Wo)

    # bf16 at the source: the cast fuses into the weighted-sum/transpose fusion and
    # halves the cols_T HBM write (and the deform GEMM's A-side read).
    return samp.transpose(1, 2, 0, 3, 4).reshape(c * kk, m).astype(jnp.bfloat16)


# --------------------------- Full forward ------------------------------------

def deformable_conv2d_forward(x, w_off, b_off, w_mod, b_mod, w_reg, b_reg, stride, pad):
    cout, cin, kh, kw = w_reg.shape
    kk = kh * kw
    n = x.shape[0]

    # Fused offset + modulator heads: one shared (transposed) im2col read, one kernel,
    # in-kernel 2*sigmoid (= 1 + tanh(z/2)) applied to the modulator columns only.
    a_t, hout, wout = im2col_t(x, kh, kw, stride, pad)
    off_t, mod_t = head_gemm(
        a_t,
        w_off.reshape(2 * kk, cin * kk), b_off,
        w_mod.reshape(kk, cin * kk), b_mod)        # off_t: [2kk, M] f32, mod_t: [kk, M] bf16

    # Deformable bilinear sampling (JAX glue) -> transposed im2col matrix in bf16.
    cols_t = deformable_im2col_t(x, off_t, kh, kw, stride, pad, hout, wout)

    # Modulated deformable conv as a transposed GEMM; mask broadcast happens in-kernel.
    out_t = deform_gemm(cols_t, mod_t, w_reg.reshape(cout, cin * kk), b_reg, cin=cin)

    # [Cout, N*Ho*Wo] -> NCHW: permute of outer dims moving Ho*Wo-contiguous blocks.
    return out_t.reshape(cout, n, hout, wout).transpose(1, 0, 2, 3)


# --------------------------- Main ---------------------------------------------

if __name__ == "__main__":
    N, Cin, H, W = 2, 4, 16, 16
    Cout, kh, kw = 8, 3, 3
    stride, pad = (1, 1), (1, 1)

    key = jax.random.PRNGKey(0)
    kx, kw_reg, kb_reg = jax.random.split(key, 3)
    x = jax.random.normal(kx, (N, Cin, H, W), jnp.float32)

    # offset / modulator convs are zero-initialized in the module's __init__
    w_off = jnp.zeros((2 * kh * kw, Cin, kh, kw), jnp.float32)
    b_off = jnp.zeros((2 * kh * kw,), jnp.float32)
    w_mod = jnp.zeros((kh * kw, Cin, kh, kw), jnp.float32)
    b_mod = jnp.zeros((kh * kw,), jnp.float32)

    # regular conv: PyTorch-style uniform(-1/sqrt(fan_in), 1/sqrt(fan_in))
    bound = 1.0 / math.sqrt(Cin * kh * kw)
    w_reg = jax.random.uniform(kw_reg, (Cout, Cin, kh, kw), jnp.float32, -bound, bound)
    b_reg = jax.random.uniform(kb_reg, (Cout,), jnp.float32, -bound, bound)

    out = deformable_conv2d_forward(x, w_off, b_off, w_mod, b_mod, w_reg, b_reg, stride, pad)
    out = jax.block_until_ready(out)
    assert out.shape == (N, Cout, H, W), out.shape

    # sanity: zero offsets + 2*sigmoid(0)=1 modulation -> equals a standard conv
    # (5e-2 tolerance covers the bf16 cast of the sampled cols; accumulation is f32)
    ref = lax.conv_general_dilated(
        x, w_reg, stride, [(1, 1), (1, 1)],
        dimension_numbers=("NCHW", "OIHW", "NCHW")) + b_reg[None, :, None, None]
    err = float(jnp.max(jnp.abs(out - ref)))
    assert err < 5e-2, err

    print("KERNEL_OK")
</pallas_src>

<mosaic_0001>
module attributes {stable_mosaic.version = 11 : i64} {
  func.func @_head_kernel(%arg0: i32, %arg1: memref<36x128xf32, #tpu.memory_space<vmem>>, %arg2: memref<18x36xf32, #tpu.memory_space<vmem>>, %arg3: memref<18x1xf32, #tpu.memory_space<vmem>>, %arg4: memref<9x36xf32, #tpu.memory_space<vmem>>, %arg5: memref<9x1xf32, #tpu.memory_space<vmem>>, %arg6: memref<18x128xf32, #tpu.memory_space<vmem>>, %arg7: memref<9x128xbf16, #tpu.memory_space<vmem>>) attributes {dimension_semantics = [#tpu.dimension_semantics<parallel>], iteration_bounds = array<i64: 4>, scalar_prefetch = 0 : i64, scratch_operands = 0 : i64, tpu.core_type = #tpu.core_type<tc>, window_params = [{transform_indices = @transform_0, window_bounds = array<i64: 36, 128>}, {pipeline_mode = #tpu.pipeline_mode<synchronous>, transform_indices = @transform_1, window_bounds = array<i64: 18, 36>}, {pipeline_mode = #tpu.pipeline_mode<synchronous>, transform_indices = @transform_2, window_bounds = array<i64: 18, 1>}, {pipeline_mode = #tpu.pipeline_mode<synchronous>, transform_indices = @transform_3, window_bounds = array<i64: 9, 36>}, {pipeline_mode = #tpu.pipeline_mode<synchronous>, transform_indices = @transform_4, window_bounds = array<i64: 9, 1>}, {transform_indices = @transform_5, window_bounds = array<i64: 18, 128>}, {transform_indices = @transform_6, window_bounds = array<i64: 9, 128>}]} {
    %c0 = arith.constant 0 : index
    %c0_0 = arith.constant 0 : index
    %0 = vector.load %arg1[%c0, %c0_0] : memref<36x128xf32, #tpu.memory_space<vmem>>, vector<36x128xf32>
    %c0_1 = arith.constant 0 : index
    %c0_2 = arith.constant 0 : index
    %1 = vector.load %arg2[%c0_1, %c0_2] : memref<18x36xf32, #tpu.memory_space<vmem>>, vector<18x36xf32>
    %cst = arith.constant dense<0.000000e+00> : vector<18x128xf32>
    %2 = tpu.matmul %1, %0, %cst {dimension_numbers = #tpu.dot_dimension_numbers<[1], [0], [0], [1], [0, 0, 1, 1], [], []>} : vector<18x36xf32>, vector<36x128xf32>, vector<18x128xf32> -> vector<18x128xf32>
    %c0_3 = arith.constant 0 : index
    %c0_4 = arith.constant 0 : index
    %3 = vector.load %arg3[%c0_3, %c0_4] : memref<18x1xf32, #tpu.memory_space<vmem>>, vector<18x1xf32>
    %4 = vector.broadcast %3 : vector<18x1xf32> to vector<18x128xf32>
    %5 = arith.addf %2, %4 : vector<18x128xf32>
    %c0_5 = arith.constant 0 : index
    %c0_6 = arith.constant 0 : index
    %6 = vector.load %arg6[%c0_5, %c0_6] : memref<18x128xf32, #tpu.memory_space<vmem>>, vector<18x128xf32>
    tpu.vector_store %arg6[%c0_5, %c0_6], %5 {strides = array<i32>} : memref<18x128xf32, #tpu.memory_space<vmem>>, vector<18x128xf32>,
    %c0_7 = arith.constant 0 : index
    %c0_8 = arith.constant 0 : index
    %7 = vector.load %arg4[%c0_7, %c0_8] : memref<9x36xf32, #tpu.memory_space<vmem>>, vector<9x36xf32>
    %cst_9 = arith.constant dense<0.000000e+00> : vector<9x128xf32>
    %8 = tpu.matmul %7, %0, %cst_9 {dimension_numbers = #tpu.dot_dimension_numbers<[1], [0], [0], [1], [0, 0, 1, 1], [], []>} : vector<9x36xf32>, vector<36x128xf32>, vector<9x128xf32> -> vector<9x128xf32>
    %c0_10 = arith.constant 0 : index
    %c0_11 = arith.constant 0 : index
    %9 = vector.load %arg5[%c0_10, %c0_11] : memref<9x1xf32, #tpu.memory_space<vmem>>, vector<9x1xf32>
    %10 = vector.broadcast %9 : vector<9x1xf32> to vector<9x128xf32>
    %11 = arith.addf %8, %10 : vector<9x128xf32>
    %cst_12 = arith.constant 5.000000e-01 : f32
    %12 = vector.broadcast %cst_12 : f32 to vector<9x128xf32>
    %13 = arith.mulf %12, %11 : vector<9x128xf32>
    %14 = math.tanh %13 : vector<9x128xf32>
    %cst_13 = arith.constant 1.000000e+00 : f32
    %15 = vector.broadcast %cst_13 : f32 to vector<9x128xf32>
    %16 = arith.addf %15, %14 : vector<9x128xf32>
    %17 = arith.truncf %16 : vector<9x128xf32> to vector<9x128xbf16>
    %c0_14 = arith.constant 0 : index
    %c0_15 = arith.constant 0 : index
    %18 = vector.load %arg7[%c0_14, %c0_15] : memref<9x128xbf16, #tpu.memory_space<vmem>>, vector<9x128xbf16>
    tpu.vector_store %arg7[%c0_14, %c0_15], %17 {strides = array<i32>} : memref<9x128xbf16, #tpu.memory_space<vmem>>, vector<9x128xbf16>,
    return
  }
  func.func @transform_0(%arg0: i32) -> (i32, i32) {
    %c0_i32 = arith.constant 0 : i32
    %c0_i32_0 = arith.constant 0 : i32
    return %c0_i32, %arg0 : i32, i32
  }
  func.func @transform_1(%arg0: i32) -> (i32, i32) {
    %c0_i32 = arith.constant 0 : i32
    %c0_i32_0 = arith.constant 0 : i32
    %c0_i32_1 = arith.constant 0 : i32
    return %c0_i32, %c0_i32_0 : i32, i32
  }
  func.func @transform_2(%arg0: i32) -> (i32, i32) {
    %c0_i32 = arith.constant 0 : i32
    %c0_i32_0 = arith.constant 0 : i32
    %c0_i32_1 = arith.constant 0 : i32
    return %c0_i32, %c0_i32_0 : i32, i32
  }
  func.func @transform_3(%arg0: i32) -> (i32, i32) {
    %c0_i32 = arith.constant 0 : i32
    %c0_i32_0 = arith.constant 0 : i32
    %c0_i32_1 = arith.constant 0 : i32
    return %c0_i32, %c0_i32_0 : i32, i32
  }
  func.func @transform_4(%arg0: i32) -> (i32, i32) {
    %c0_i32 = arith.constant 0 : i32
    %c0_i32_0 = arith.constant 0 : i32
    %c0_i32_1 = arith.constant 0 : i32
    return %c0_i32, %c0_i32_0 : i32, i32
  }
  func.func @transform_5(%arg0: i32) -> (i32, i32) {
    %c0_i32 = arith.constant 0 : i32
    %c0_i32_0 = arith.constant 0 : i32
    return %c0_i32, %arg0 : i32, i32
  }
  func.func @transform_6(%arg0: i32) -> (i32, i32) {
    %c0_i32 = arith.constant 0 : i32
    %c0_i32_0 = arith.constant 0 : i32
    return %c0_i32, %arg0 : i32, i32
  }
}

</mosaic_0001>

<llo_original>
// kernel: tpu_custom_call.1
$region0: #{tpu_custom_call.1}
  #allocation0 [shape = 'u32[]', space=smem, size = 0x4, offset = 0x4, fixed_abs, tag = 'smem constant byte address 0x4 - core index']
  #allocation1 [shape = 'u32[72,128]{1,0:T(1,128)}', space=vmem, size = 0x9000, scoped, tag = 'internal scratch']
  %s0 = inlined_call_operand.hbm [shape: f32[36,512], index: 0, kind: input, shape index: {}]
  %s1 = inlined_call_operand.vmem [shape: f32[18,36], index: 1, kind: input, shape index: {}]
  %s2 = inlined_call_operand.vmem [shape: f32[18,1], index: 2, kind: input, shape index: {}]
  %s3 = inlined_call_operand.vmem [shape: f32[9,36], index: 3, kind: input, shape index: {}]
  %s4 = inlined_call_operand.vmem [shape: f32[9,1], index: 4, kind: input, shape index: {}]
  %s5 = inlined_call_operand.hbm [shape: f32[18,512], index: 5, kind: output, shape index: {0}]
  %s6 = inlined_call_operand.hbm [shape: bf16[9,512], index: 6, kind: output, shape index: {1}]
  %7 = xla_tuple %s5, %s6
  %s8 = sld [smem:[#allocation0]]
  $region65: #{tpu_custom_call.1} parent=0
    _
  %s10 = ssub.s32 1, %s8
  %s11 = scalar_select 0, %s10, %s8
  $region1: #{tpu_custom_call.1} parent=0
    #allocation2 [shape = 'u8[40960]{0}', space=vmem, size = 0xa000, scoped, tag = 'input window, operand 0']
    #allocation3 [shape = 's32[2]{0}', space=sflag, size = 0x8, scoped, tag = 'scoped memory for tpu_custom_call.1']
    #allocation4 [shape = 's32[2]{0}', space=sflag, size = 0x8, scoped, tag = 'scoped memory for tpu_custom_call.1']
    #allocation5 [shape = 'u8[24576]{0}', space=vmem, size = 0x6000, scoped, tag = 'output window, operand 0']
    #allocation6 [shape = 'u8[8192]{0}', space=vmem, size = 0x2000, scoped, tag = 'output window, operand 1']
    #allocation7 [shape = 's32[2]{0}', space=sflag, size = 0x8, scoped, tag = 'scoped memory for tpu_custom_call.1']
    %12 = vsyncpa [#allocation3], 0
    %s13 = scalar_lea.sflag [#allocation3], 1
    %14 = vsyncpa %s13, 0
    %15 = vsyncpa [#allocation4], 0
    %s16 = scalar_lea.sflag [#allocation4], 1
    %17 = vsyncpa %s16, 0
    %18 = vsyncpa [#allocation7], 0
    %s19 = scalar_lea.sflag [#allocation7], 1
    %20 = vsyncpa %s19, 0
    loop: start=0, step=1, limit=6
    $region2: #{tpu_custom_call.1} parent=1 // loop_pre_header
      _
    $region3: #{tpu_custom_call.1} parent=1 // loop_header
      %s22 = sphi 0, %s26
      %p23 = scmp.ge.s32.totalorder %s22, 6
      %s32 = sphi 0, %s34
      %s35 = sphi 0, %s32
      %s36 = sphi 0, %s35
      %s52 = sphi 0, %s36
      %s56 = sphi 0, %s56
      %s58 = sphi 0, %s56
      %s59 = sphi 0, %s58
      %s73 = sphi 0, %s59
      %s77 = sphi 0, %s77
      %s79 = sphi 0, %s77
      %s80 = sphi 0, %s79
      %s94 = sphi 0, %s80
      %s98 = sphi 0, %s98
      %s100 = sphi 0, %s98
      %s101 = sphi 0, %s100
      %s115 = sphi 0, %s101
      %s119 = sphi 0, %s119
      %s121 = sphi 0, %s119
      %s122 = sphi 0, %s121
      %s136 = sphi 0, %s122
      %s142 = sphi 0, %s144
      %s145 = sphi 0, %s142
      %s146 = sphi 0, %s145
      %s162 = sphi 0, %s146
      %s168 = sphi 0, %s170
      %s171 = sphi 0, %s168
      %s172 = sphi 0, %s171
      %s188 = sphi 0, %s172
    $region4: #{tpu_custom_call.1} parent=1 // loop_header_branch
      %25 = sbr.rel (%p23) target = $region8
    $region5: #{tpu_custom_call.1} parent=1 // loop_body
      %s27 = ssub.s32 %s22, 1
      %s28 = ssub.s32 %s22, 2
      %s29 = sadd.s32 %s22, 1
      %s30 = ssub.s32 %s22, %s29
      %p31 = scmp.eq.s32.totalorder %s30, 0
      %s33 = sadd.s32 %s32, 1
      %s34 = scalar_select %p31, %s32, %s33
      %p37 = pneg %p31
      %p38 = scmp.eq.s32.totalorder %s22, 3
      %p39 = por %p37, %p38
      %p40 = scmp.ne.s32.totalorder %s32, %s35
      %p41 = scmp.eq.s32.totalorder %s22, 0
      %p42 = por %p40, %p41
      %p43 = scmp.ne.s32.totalorder %s32, %s35
      %p44 = scmp.eq.s32.totalorder %s27, 3
      %p45 = por %p43, %p44
      %p46 = scmp.ne.s32.totalorder %s35, %s36
      %p47 = scmp.eq.s32.totalorder %s27, 0
      %p48 = por %p46, %p47
      %p49 = scmp.ne.s32.totalorder %s35, %s36
      %p50 = scmp.eq.s32.totalorder %s28, 3
      %p51 = por %p49, %p50
      %p53 = scmp.ne.s32.totalorder %s36, %s52
      %p54 = scmp.eq.s32.totalorder %s28, 0
      %p55 = por %p53, %p54
      %s57 = sadd.s32 %s56, 1
      %p60 = scmp.eq.s32.totalorder %s22, 3
      %p61 = scmp.ne.s32.totalorder %s56, %s58
      %p62 = scmp.eq.s32.totalorder %s22, 0
      %p63 = por %p61, %p62
      %p64 = scmp.ne.s32.totalorder %s56, %s58
      %p65 = scmp.eq.s32.totalorder %s27, 3
      %p66 = por %p64, %p65
      %p67 = scmp.ne.s32.totalorder %s58, %s59
      %p68 = scmp.eq.s32.totalorder %s27, 0
      %p69 = por %p67, %p68
      %p70 = scmp.ne.s32.totalorder %s58, %s59
      %p71 = scmp.eq.s32.totalorder %s28, 3
      %p72 = por %p70, %p71
      %p74 = scmp.ne.s32.totalorder %s59, %s73
      %p75 = scmp.eq.s32.totalorder %s28, 0
      %p76 = por %p74, %p75
      %s78 = sadd.s32 %s77, 1
      %p81 = scmp.eq.s32.totalorder %s22, 3
      %p82 = scmp.ne.s32.totalorder %s77, %s79
      %p83 = scmp.eq.s32.totalorder %s22, 0
      %p84 = por %p82, %p83
      %p85 = scmp.ne.s32.totalorder %s77, %s79
      %p86 = scmp.eq.s32.totalorder %s27, 3
      %p87 = por %p85, %p86
      %p88 = scmp.ne.s32.totalorder %s79, %s80
      %p89 = scmp.eq.s32.totalorder %s27, 0
      %p90 = por %p88, %p89
      %p91 = scmp.ne.s32.totalorder %s79, %s80
      %p92 = scmp.eq.s32.totalorder %s28, 3
      %p93 = por %p91, %p92
      %p95 = scmp.ne.s32.totalorder %s80, %s94
      %p96 = scmp.eq.s32.totalorder %s28, 0
      %p97 = por %p95, %p96
      %s99 = sadd.s32 %s98, 1
      %p102 = scmp.eq.s32.totalorder %s22, 3
      %p103 = scmp.ne.s32.totalorder %s98, %s100
      %p104 = scmp.eq.s32.totalorder %s22, 0
      %p105 = por %p103, %p104
      %p106 = scmp.ne.s32.totalorder %s98, %s100
      %p107 = scmp.eq.s32.totalorder %s27, 3
      %p108 = por %p106, %p107
      %p109 = scmp.ne.s32.totalorder %s100, %s101
      %p110 = scmp.eq.s32.totalorder %s27, 0
      %p111 = por %p109, %p110
      %p112 = scmp.ne.s32.totalorder %s100, %s101
      %p113 = scmp.eq.s32.totalorder %s28, 3
      %p114 = por %p112, %p113
      %p116 = scmp.ne.s32.totalorder %s101, %s115
      %p117 = scmp.eq.s32.totalorder %s28, 0
      %p118 = por %p116, %p117
      %s120 = sadd.s32 %s119, 1
      %p123 = scmp.eq.s32.totalorder %s22, 3
      %p124 = scmp.ne.s32.totalorder %s119, %s121
      %p125 = scmp.eq.s32.totalorder %s22, 0
      %p126 = por %p124, %p125
      %p127 = scmp.ne.s32.totalorder %s119, %s121
      %p128 = scmp.eq.s32.totalorder %s27, 3
      %p129 = por %p127, %p128
      %p130 = scmp.ne.s32.totalorder %s121, %s122
      %p131 = scmp.eq.s32.totalorder %s27, 0
      %p132 = por %p130, %p131
      %p133 = scmp.ne.s32.totalorder %s121, %s122
      %p134 = scmp.eq.s32.totalorder %s28, 3
      %p135 = por %p133, %p134
      %p137 = scmp.ne.s32.totalorder %s122, %s136
      %p138 = scmp.eq.s32.totalorder %s28, 0
      %p139 = por %p137, %p138
      %s140 = ssub.s32 %s22, %s29
      %p141 = scmp.eq.s32.totalorder %s140, 0
      %s143 = sadd.s32 %s142, 1
      %s144 = scalar_select %p141, %s142, %s143
      %p147 = pneg %p141
      %p148 = scmp.eq.s32.totalorder %s22, 3
      %p149 = por %p147, %p148
      %p150 = scmp.ne.s32.totalorder %s142, %s145
      %p151 = scmp.eq.s32.totalorder %s22, 0
      %p152 = por %p150, %p151
      %p153 = scmp.ne.s32.totalorder %s142, %s145
      %p154 = scmp.eq.s32.totalorder %s27, 3
      %p155 = por %p153, %p154
      %p156 = scmp.ne.s32.totalorder %s145, %s146
      %p157 = scmp.eq.s32.totalorder %s27, 0
      %p158 = por %p156, %p157
      %p159 = scmp.ne.s32.totalorder %s145, %s146
      %p160 = scmp.eq.s32.totalorder %s28, 3
      %p161 = por %p159, %p160
      %p163 = scmp.ne.s32.totalorder %s146, %s162
      %p164 = scmp.eq.s32.totalorder %s28, 0
      %p165 = por %p163, %p164
      %s166 = ssub.s32 %s22, %s29
      %p167 = scmp.eq.s32.totalorder %s166, 0
      %s169 = sadd.s32 %s168, 1
      %s170 = scalar_select %p167, %s168, %s169
      %p173 = pneg %p167
      %p174 = scmp.eq.s32.totalorder %s22, 3
      %p175 = por %p173, %p174
      %p176 = scmp.ne.s32.totalorder %s168, %s171
      %p177 = scmp.eq.s32.totalorder %s22, 0
      %p178 = por %p176, %p177
      %p179 = scmp.ne.s32.totalorder %s168, %s171
      %p180 = scmp.eq.s32.totalorder %s27, 3
      %p181 = por %p179, %p180
      %p182 = scmp.ne.s32.totalorder %s171, %s172
      %p183 = scmp.eq.s32.totalorder %s27, 0
      %p184 = por %p182, %p183
      %p185 = scmp.ne.s32.totalorder %s171, %s172
      %p186 = scmp.eq.s32.totalorder %s28, 3
      %p187 = por %p185, %p186
      %p189 = scmp.ne.s32.totalorder %s172, %s188
      %p190 = scmp.eq.s32.totalorder %s28, 0
      %p191 = por %p189, %p190
      %p192 = scmp.le.s32.totalorder 1, %s22
      %p193 = scmp.lt.s32.totalorder %s22, 5
      %p194 = pnand %p192, %p193
      %p195 = pneg %p194
      // Predicated region
      $region9: #{tpu_custom_call.1} parent=5 // pred_check
        _
      $region10: #{tpu_custom_call.1} parent=5 // pred_check_branch
        %197 = sbr.rel (%p194) target = $region12
      $region11: #{tpu_custom_call.1} parent=5 // pred_region
        %s198 = ssub.s32 %s22, 1
        // Predicated region
        $region13: #{tpu_custom_call.1} parent=11 // pred_check
          %p199 = pneg %p69
        $region14: #{tpu_custom_call.1} parent=11 // pred_check_branch
          %201 = sbr.rel (%p199) target = $region16
        $region15: #{tpu_custom_call.1} parent=11 // pred_region
          _
        $region16: #{tpu_custom_call.1} parent=11 // pred_fallthru
          _
        // Predicated region
        $region17: #{tpu_custom_call.1} parent=11 // pred_check
          %p202 = pneg %p90
        $region18: #{tpu_custom_call.1} parent=11 // pred_check_branch
          %204 = sbr.rel (%p202) target = $region20
        $region19: #{tpu_custom_call.1} parent=11 // pred_region
          _
        $region20: #{tpu_custom_call.1} parent=11 // pred_fallthru
          _
        // Predicated region
        $region21: #{tpu_custom_call.1} parent=11 // pred_check
          %p205 = pneg %p111
        $region22: #{tpu_custom_call.1} parent=11 // pred_check_branch
          %207 = sbr.rel (%p205) target = $region24
        $region23: #{tpu_custom_call.1} parent=11 // pred_region
          _
        $region24: #{tpu_custom_call.1} parent=11 // pred_fallthru
          _
        // Predicated region
        $region25: #{tpu_custom_call.1} parent=11 // pred_check
          %p208 = pneg %p132
        $region26: #{tpu_custom_call.1} parent=11 // pred_check_branch
          %210 = sbr.rel (%p208) target = $region28
        $region27: #{tpu_custom_call.1} parent=11 // pred_region
          _
        $region28: #{tpu_custom_call.1} parent=11 // pred_fallthru
          _
      $region12: #{tpu_custom_call.1} parent=5 // pred_fallthru
        _
      %p211 = scmp.lt.s32.totalorder %s22, 4
      // Predicated region
      $region29: #{tpu_custom_call.1} parent=5 // pred_check
        %p212 = pneg %p211
      $region30: #{tpu_custom_call.1} parent=5 // pred_check_branch
        %214 = sbr.rel (%p212) target = $region32
      $region31: #{tpu_custom_call.1} parent=5 // pred_region
        // Predicated region
        $region33: #{tpu_custom_call.1} parent=31 // pred_check
          %p215 = pneg %p42
        $region34: #{tpu_custom_call.1} parent=31 // pred_check_branch
          %217 = sbr.rel (%p215) target = $region36
        $region35: #{tpu_custom_call.1} parent=31 // pred_region
          %s218 = sand.u32 %s32, 1
          %s219 = scalar_lea.sflag [#allocation3], %s218
          %s220 = sand.u32 %s32, 1
          %s221 = smul.addr %s220, 40
          %s222 = scalar_lea.vmem [#allocation2], %s221
          %224 = vsyncadd %s219, 0
          %s225 = smul.addr %s22, 8
          %s226 = scalar_lea.hbm %s0, %s225
          %s227 = sshll.u32 %s226, 4
          %s228 = int_to_ptr.hbm [resolvable:$true] %s227
          %s229 = sshll.u32 %s222, 4
          %s230 = int_to_ptr.vmem [resolvable:$true] %s229
          %235 = dma.hbm_to_vmem [thread:$0]  %s228, 640, %s230, %s219, 512, 128, 8
        $region36: #{tpu_custom_call.1} parent=31 // pred_fallthru
          _
      $region32: #{tpu_custom_call.1} parent=5 // pred_fallthru
        _
      %p236 = scmp.le.s32.totalorder 1, %s22
      %p237 = scmp.lt.s32.totalorder %s22, 5
      %p238 = pnand %p236, %p237
      %p239 = pneg %p238
      // Predicated region
      $region37: #{tpu_custom_call.1} parent=5 // pred_check
        _
      $region38: #{tpu_custom_call.1} parent=5 // pred_check_branch
        %241 = sbr.rel (%p238) target = $region40
      $region39: #{tpu_custom_call.1} parent=5 // pred_region
        %s242 = ssub.s32 %s22, 1
        %s243 = sand.u32 %s35, 1
        %s244 = scalar_lea.sflag [#allocation3], %s243
        %s245 = sand.u32 %s35, 1
        %s246 = smul.addr %s245, 40
        %s247 = scalar_lea.vmem [#allocation2], %s246
        // Predicated region
        $region41: #{tpu_custom_call.1} parent=39 // pred_check
          %p248 = pneg %p48
        $region42: #{tpu_custom_call.1} parent=39 // pred_check_branch
          %250 = sbr.rel (%p248) target = $region44
        $region43: #{tpu_custom_call.1} parent=39 // pred_region
          %252 = dma.done %s244, 640
        $region44: #{tpu_custom_call.1} parent=39 // pred_fallthru
          _
        %s253 = sand.u32 %s35, 1
        %s254 = scalar_lea.sflag [#allocation3], %s253
        %s255 = sand.u32 %s35, 1
        %s256 = smul.addr %s255, 40
        %s257 = scalar_lea.vmem [#allocation2], %s256
        %p258 = pneg %p48
        %p259 = pneg %p45
        %p260 = pneg %p69
        %p261 = pneg %p66
        %p262 = pneg %p90
        %p263 = pneg %p87
        %p264 = pneg %p111
        %p265 = pneg %p108
        %p266 = pneg %p132
        %p267 = pneg %p129
        %p268 = pneg %p158
        %p269 = pneg %p155
        %s270 = sand.u32 %s145, 1
        %s271 = scalar_lea.sflag [#allocation4], %s270
        %s272 = sand.u32 %s145, 1
        %s273 = smul.addr %s272, 24
        %s274 = scalar_lea.vmem [#allocation5], %s273
        %p275 = pneg %p184
        %p276 = pneg %p181
        %s277 = sand.u32 %s171, 1
        %s278 = scalar_lea.sflag [#allocation7], %s277
        %s279 = sand.u32 %s171, 1
        %s280 = smul.addr %s279, 8
        %s281 = scalar_lea.vmem [#allocation6], %s280
        %v282 = vld [vmem:[%s247] sm:$0xff]
        %v283 = vld [vmem:[%s247 + $0x8] sm:$0xff]
        %v284 = vld [vmem:[%s247 + $0x10] sm:$0xff]
        %v285 = vld [vmem:[%s247 + $0x18] sm:$0xff]
        %v286 = vld [vmem:[%s247 + $0x20] sm:$0xf]
        %v287 = vld [vmem:[%s1] sm:$0xff]
        %v288 = vld [vmem:[%s1 + $0x8] sm:$0xff]
        %v289 = vld [vmem:[%s1 + $0x10] sm:$0x3]
        %v290 = vld [vmem:[%s2] sm:$0xff]
        %v291 = vld [vmem:[%s2 + $0x8] sm:$0xff]
        %v292 = vld [vmem:[%s2 + $0x10] sm:$0x3]
        %294 = vset.pattern.permute.xlu0 0
        %295 = vperm.xlu0 %294, %v290
        %v296 = vpop.permute.xlu0 %295
        %299 = vset.pattern.permute.xlu0 0
        %300 = vperm.xlu0 %299, %v291
        %v301 = vpop.permute.xlu0 %300
        %304 = vset.pattern.permute.xlu0 0
        %305 = vperm.xlu0 %304, %v292
        %v306 = vpop.permute.xlu0 %305
        %vm308 = vcmask 293888
        %v310 = vsel %vm308, %v287, 0
        %v313 = vsel %vm308, %v288, 0
        %v316 = vsel %vm308, %v289, 0
        %vm318 = vcmask 1043456
        %v320 = vsel %vm318, %v286, 0
        %322 = vmatpush.msra.mxu0 0.0
        %323 = vmatpush.msra.mxu0 0.0
        %324 = vmatpush.msra.mxu0 0.0
        %325 = vmatpush.msra.mxu0 0.0
        %326 = vmatpush.msra.mxu0 0.0
        %327 = vmatpush.msra.mxu0 0.0
        %328 = vmatpush.msra.mxu0 0.0
        %329 = vmatpush.msra.mxu0 0.0
        %330 = vmatpush.msra.mxu0 0.0
        %331 = vmatpush.msra.mxu0 0.0
        %332 = vmatpush.msra.mxu0 0.0
        %333 = vmatpush.msra.mxu0 %v320
        %334 = vmatpush.msra.mxu0 %v285
        %335 = vmatpush.msra.mxu0 %v284
        %336 = vmatpush.msra.mxu0 %v283
        %337 = vmatpush.msra.mxu0 %v282
        %338 = vmatmul.f32.gmra.mxu0 %v310
        %v339 = vpop.f32.mrf.mxu0
        %v340 = vadd.f32 %v296, %v339
        %341 = vmatmul.f32.gmra.mxu0 %v313
        %v342 = vpop.f32.mrf.mxu0
        %v343 = vadd.f32 %v301, %v342
        %344 = vmatmul.f32.gmra.mxu0 %v316
        %v345 = vpop.f32.mrf.mxu0
        %v346 = vadd.f32 %v306, %v345
        %347 = vdwg.mxu0
        %348 = vst [vmem:[%s274] sm:$0xff] %v340
        %349 = vst [vmem:[%s274 + $0x8] sm:$0xff] %v343
        %350 = vst [vmem:[%s274 + $0x10] sm:$0x3] %v346
        %v351 = vld [vmem:[%s3] sm:$0xff]
        %v352 = vld [vmem:[%s3 + $0x8] sm:$0x1]
        %v353 = vld [vmem:[%s4] sm:$0xff]
        %v354 = vld [vmem:[%s4 + $0x8] sm:$0x1]
        %356 = vset.pattern.permute.xlu0 0
        %357 = vperm.xlu0 %356, %v353
        %v358 = vpop.permute.xlu0 %357
        %361 = vset.pattern.permute.xlu0 0
        %362 = vperm.xlu0 %361, %v354
        %v363 = vpop.permute.xlu0 %362
        %v366 = vsel %vm308, %v351, 0
        %v369 = vsel %vm308, %v352, 0
        %371 = vmatpush.msra.mxu0 0.0
        %372 = vmatpush.msra.mxu0 0.0
        %373 = vmatpush.msra.mxu0 0.0
        %374 = vmatpush.msra.mxu0 0.0
        %375 = vmatpush.msra.mxu0 0.0
        %376 = vmatpush.msra.mxu0 0.0
        %377 = vmatpush.msra.mxu0 0.0
        %378 = vmatpush.msra.mxu0 0.0
        %379 = vmatpush.msra.mxu0 0.0
        %380 = vmatpush.msra.mxu0 0.0
        %381 = vmatpush.msra.mxu0 0.0
        %382 = vmatpush.msra.mxu0 %v320
        %383 = vmatpush.msra.mxu0 %v285
        %384 = vmatpush.msra.mxu0 %v284
        %385 = vmatpush.msra.mxu0 %v283
        %386 = vmatpush.msra.mxu0 %v282
        %387 = vmatmul.f32.gmra.mxu0 %v366
        %v388 = vpop.f32.mrf.mxu0
        %v389 = vadd.f32 %v358, %v388
        %390 = vmatmul.f32.gmra.mxu0 %v369
        %v391 = vpop.f32.mrf.mxu0
        %v392 = vadd.f32 %v363, %v391
        %393 = vdwg.mxu0
        %v394 = vmul.f32 %v389, 0.5
        %v395 = vmul.f32 %v392, 0.5
        %v396 = vtanh.pop %v394
        %v397 = vtanh.pop %v395
        %v398 = vadd.f32 %v396, 1.0
        %v399 = vadd.f32 %v397, 1.0
        %v400 = vpack.c.bf16 %v398, %v398
        %v401 = vpack.c.bf16 %v399, %v399
        %402 = vst [vmem:[%s281] sm:$0xf] %v400
        %vm403 = vcmask 1040384
        %vm404 = vsmask.f32 256
        %vm405 = vmand %vm403, %vm404
        %v406 = vld [vmem:[%s281 + $0x4] sm:$0x1]
        %v407 = vsel %vm405, %v401, %v406
        %408 = vst [vmem:[%s281 + $0x4] sm:$0x1] %v407
        %s409 = sand.u32 %s145, 1
        %s410 = scalar_lea.sflag [#allocation4], %s409
        %s411 = sand.u32 %s145, 1
        %s412 = smul.addr %s411, 24
        %s413 = scalar_lea.vmem [#allocation5], %s412
        %s414 = sand.u32 %s171, 1
        %s415 = scalar_lea.sflag [#allocation7], %s414
        %s416 = sand.u32 %s171, 1
        %s417 = smul.addr %s416, 8
        %s418 = scalar_lea.vmem [#allocation6], %s417
        // Predicated region
        $region45: #{tpu_custom_call.1} parent=39 // pred_check
          %p419 = pneg %p155
        $region46: #{tpu_custom_call.1} parent=39 // pred_check_branch
          %421 = sbr.rel (%p419) target = $region48
        $region47: #{tpu_custom_call.1} parent=39 // pred_region
          %423 = vsyncadd %s410, 0
          %s424 = smul.addr %s27, 8
          %s425 = scalar_lea.hbm %s5, %s424
          %s426 = sshll.u32 %s413, 4
          %s427 = int_to_ptr.vmem [resolvable:$true] %s426
          %s428 = sshll.u32 %s425, 4
          %s429 = int_to_ptr.hbm [resolvable:$true] %s428
          %434 = dma.vmem_to_hbm [thread:$0]  %s427, 384, %s429, %s410, 128, 512, 8
        $region48: #{tpu_custom_call.1} parent=39 // pred_fallthru
          _
        // Predicated region
        $region49: #{tpu_custom_call.1} parent=39 // pred_check
          %p435 = pneg %p181
        $region50: #{tpu_custom_call.1} parent=39 // pred_check_branch
          %437 = sbr.rel (%p435) target = $region52
        $region51: #{tpu_custom_call.1} parent=39 // pred_region
          %439 = vsyncadd %s415, 0
          %s440 = smul.addr %s27, 4
          %s441 = scalar_lea.hbm %s6, %s440
          %s442 = sshll.u32 %s418, 4
          %s443 = int_to_ptr.vmem [resolvable:$true] %s442
          %s444 = sshll.u32 %s441, 4
          %s445 = int_to_ptr.hbm [resolvable:$true] %s444
          %450 = dma.vmem_to_hbm [thread:$0]  %s443, 128, %s445, %s415, 64, 256, 4
        $region52: #{tpu_custom_call.1} parent=39 // pred_fallthru
          _
      $region40: #{tpu_custom_call.1} parent=5 // pred_fallthru
        _
      %p451 = scmp.le.s32.totalorder 2, %s22
      // Predicated region
      $region53: #{tpu_custom_call.1} parent=5 // pred_check
        %p452 = pneg %p451
      $region54: #{tpu_custom_call.1} parent=5 // pred_check_branch
        %454 = sbr.rel (%p452) target = $region56
      $region55: #{tpu_custom_call.1} parent=5 // pred_region
        %s455 = ssub.s32 %s22, 2
        // Predicated region
        $region57: #{tpu_custom_call.1} parent=55 // pred_check
          %p456 = pneg %p161
        $region58: #{tpu_custom_call.1} parent=55 // pred_check_branch
          %458 = sbr.rel (%p456) target = $region60
        $region59: #{tpu_custom_call.1} parent=55 // pred_region
          %s459 = sand.u32 %s146, 1
          %s460 = scalar_lea.sflag [#allocation4], %s459
          %s461 = sand.u32 %s146, 1
          %s462 = smul.addr %s461, 24
          %s463 = scalar_lea.vmem [#allocation5], %s462
          %465 = dma.done %s460, 384
        $region60: #{tpu_custom_call.1} parent=55 // pred_fallthru
          _
        // Predicated region
        $region61: #{tpu_custom_call.1} parent=55 // pred_check
          %p466 = pneg %p187
        $region62: #{tpu_custom_call.1} parent=55 // pred_check_branch
          %468 = sbr.rel (%p466) target = $region64
        $region63: #{tpu_custom_call.1} parent=55 // pred_region
          %s469 = sand.u32 %s172, 1
          %s470 = scalar_lea.sflag [#allocation7], %s469
          %s471 = sand.u32 %s172, 1
          %s472 = smul.addr %s471, 8
          %s473 = scalar_lea.vmem [#allocation6], %s472
          %475 = dma.done %s470, 128
        $region64: #{tpu_custom_call.1} parent=55 // pred_fallthru
          _
      $region56: #{tpu_custom_call.1} parent=5 // pred_fallthru
        _
    $region6: #{tpu_custom_call.1} parent=1 // loop_footer
      %s26 = sadd.s32 1, %s22
    $region7: #{tpu_custom_call.1} parent=1 // loop_footer_branch
      %21 = sbr.rel target = $region3
    $region8: #{tpu_custom_call.1} parent=1 // loop_exit
      _
    %476 = vsyncpa [#allocation3], 1
    %s477 = scalar_lea.sflag [#allocation3], 1
    %478 = vsyncpa %s477, 1
    %479 = vsyncpa [#allocation4], 1
    %s480 = scalar_lea.sflag [#allocation4], 1
    %481 = vsyncpa %s480, 1
    %482 = vsyncpa [#allocation7], 1
    %s483 = scalar_lea.sflag [#allocation7], 1
    %484 = vsyncpa %s483, 1

</llo_original>
